<compile_context>
chip_gen: v7x
topology: tpu7x:2x2x1
jax: 0.10.0
libtpu: 0.0.40
codegen_flags: <defaults>
</compile_context>

<pallas_src>
import functools

import jax
import jax.numpy as jnp
from jax.experimental import pallas as pl
from jax.experimental.pallas import tpu as pltpu


def rc1d_kernel(x_ref, w1_ref,
                wc2_ref, b2_ref,
                wc3_ref, b3_ref,
                wc4_ref, b4_ref,
                w5_ref,
                o_ref, *, L):
    # x_ref: (1, R*L) -- R concatenated (batch*num_node) rows, lane-dense.
    x = x_ref[...].astype(jnp.float32)                       # (1, RL)
    RL = x.shape[-1]

    # Per-row boundary masks (lane position within its row).  Built once.
    lane = jax.lax.broadcasted_iota(jnp.int32, (1, RL), 1)
    pos = lane % L
    left_edge = pos == 0          # replicate-pad at left row boundary
    right_edge = pos == (L - 1)   # replicate-pad at right row boundary

    # conv1: 1x1 conv, 1 -> H channels, no bias (VPU broadcast multiply, f32).
    h = w1_ref[...] * x                                       # (H, 1)*(1, RL) -> (H, RL)

    def block(h, wc_ref, b_ref):
        # k=3 replicate-padded conv fused into one MXU matmul:
        #   y = Wcat @ [h[.,l-1]; h[.,l]; h[.,l+1]] + b
        # jnp.roll (static shift) lowers to slice+concatenate; values that wrap
        # across row boundaries are masked back to the edge value (replicate pad).
        hm1 = jnp.where(left_edge, h, jnp.roll(h, 1, axis=1))    # h[:, l-1]
        hp1 = jnp.where(right_edge, h, jnp.roll(h, -1, axis=1))  # h[:, l+1]
        hcat = jnp.concatenate(
            [hm1.astype(jnp.bfloat16),
             h.astype(jnp.bfloat16),
             hp1.astype(jnp.bfloat16)], axis=0)               # (3H, RL) bf16
        y = jnp.dot(wc_ref[...], hcat,
                    preferred_element_type=jnp.float32)       # bf16 x bf16 -> f32
        y = y + b_ref[...]                                    # bias, f32
        return jnp.maximum(y + h, 0.0)                        # residual + relu, f32

    h = block(h, wc2_ref, b2_ref)
    h = block(h, wc3_ref, b3_ref)
    h = block(h, wc4_ref, b4_ref)

    # conv5: the two 1x1 convs are pre-fused in the wrapper -> single (1, H) dot (f32).
    y = jnp.dot(w5_ref[...], h, preferred_element_type=jnp.float32)   # (1, RL)
    o_ref[...] = y.astype(o_ref.dtype)


@jax.jit
def rc_1d_forward(x, params):
    B, N, L = x.shape
    H = params["w1"].shape[0]
    BN = B * N

    # Pack R rows per grid step so the lane dimension is dense (aim for a few
    # hundred+ lanes per block, bounded so the working set stays tiny in VMEM).
    R = 1
    for d in range(1, BN + 1):
        if BN % d == 0 and d * L <= 4096:
            R = d
    G = BN // R
    RL = R * L

    x2 = x.reshape(G, RL).astype(jnp.float32)

    # Fuse the 3 conv taps along the contraction axis: (H, 3H), bf16 MXU operand.
    def cat_taps(w):
        return jnp.concatenate([w[0], w[1], w[2]], axis=1).astype(jnp.bfloat16)

    wc2 = cat_taps(params["w2"])
    wc3 = cat_taps(params["w3"])
    wc4 = cat_taps(params["w4"])
    # Fuse the two 1x1 convs of conv5 (no nonlinearity between them): (1, H), f32.
    w5f = jnp.dot(params["w5b"].astype(jnp.float32),
                  params["w5a"].astype(jnp.float32))

    def full_spec(shape):
        nd = len(shape)
        return pl.BlockSpec(shape, lambda i, _nd=nd: (0,) * _nd)

    kernel = functools.partial(rc1d_kernel, L=L)

    out = pl.pallas_call(
        kernel,
        out_shape=jax.ShapeDtypeStruct((G, RL), jnp.float32),
        grid=(G,),
        in_specs=[
            pl.BlockSpec((1, RL), lambda i: (i, 0)),          # x rows (lane-dense)
            full_spec((H, 1)),                                # conv1 weight (f32)
            full_spec((H, 3 * H)), full_spec((H, 1)),         # conv2 fused w (bf16), b
            full_spec((H, 3 * H)), full_spec((H, 1)),         # conv3 fused w (bf16), b
            full_spec((H, 3 * H)), full_spec((H, 1)),         # conv4 fused w (bf16), b
            full_spec((1, H)),                                # fused conv5 weight (f32)
        ],
        out_specs=pl.BlockSpec((1, RL), lambda i: (i, 0)),
        compiler_params=pltpu.CompilerParams(
            dimension_semantics=("parallel",)),               # megacore shard
    )(x2,
      params["w1"].astype(jnp.float32),
      wc2, params["b2"].astype(jnp.float32),
      wc3, params["b3"].astype(jnp.float32),
      wc4, params["b4"].astype(jnp.float32),
      w5f)

    return out.reshape(B, N, L)


def init_params(key, H):
    """Deterministic synthetic parameters matching the PyTorch module's shapes.

    conv1 : Conv1d(1, H, 1, bias=False)          -> weight stored as (H, 1)
    conv2-4: Conv1d(H, H, 3, replicate pad)      -> weight stored as (3, H, H)  (tap, out, in)
                                                    bias stored as (H, 1)
    conv5 : Conv1d(H, H//2, 1, bias=False) then Conv1d(H//2, 1, 1, bias=False)
    """
    ks = jax.random.split(key, 8)
    scale3 = 1.0 / jnp.sqrt(3.0 * H)
    return {
        "w1": jax.random.normal(ks[0], (H, 1), jnp.float32),
        "w2": jax.random.normal(ks[1], (3, H, H), jnp.float32) * scale3,
        "b2": jax.random.normal(ks[2], (H, 1), jnp.float32) * 0.1,
        "w3": jax.random.normal(ks[3], (3, H, H), jnp.float32) * scale3,
        "b3": jax.random.normal(ks[4], (H, 1), jnp.float32) * 0.1,
        "w4": jax.random.normal(ks[5], (3, H, H), jnp.float32) * scale3,
        "b4": jax.random.normal(ks[6], (H, 1), jnp.float32) * 0.1,
        "w5a": jax.random.normal(ks[7], (H // 2, H), jnp.float32) * (1.0 / jnp.sqrt(H)),
        "w5b": jax.random.normal(jax.random.fold_in(key, 99), (1, H // 2), jnp.float32)
               * (1.0 / jnp.sqrt(H // 2)),
    }


def rc_1d_reference(x, p):
    """Pure-JAX reference of the PyTorch forward (replicate-padded 1D convs).

    Mirrors the kernel's precision policy (bf16 MXU operands for the k=3 convs,
    f32 accumulation / elementwise / conv1 / conv5) so the comparison is tight.
    """
    B, N, L = x.shape
    xr = x.reshape(B * N, L).astype(jnp.float32)
    h = p["w1"][None, :, :] * xr[:, None, :]                  # (BN, H, L)
    im = jnp.maximum(jnp.arange(L) - 1, 0)
    ip = jnp.minimum(jnp.arange(L) + 1, L - 1)

    def mm(w, a):
        return jnp.einsum("ok,rkl->rol",
                          w.astype(jnp.bfloat16), a.astype(jnp.bfloat16),
                          preferred_element_type=jnp.float32)

    def c3(h, w, b):
        hm, hp = h[:, :, im], h[:, :, ip]
        return mm(w[0], hm) + mm(w[1], h) + mm(w[2], hp) + b[None, :, :]

    h = jax.nn.relu(c3(h, p["w2"], p["b2"]) + h)
    h = jax.nn.relu(c3(h, p["w3"], p["b3"]) + h)
    h = jax.nn.relu(c3(h, p["w4"], p["b4"]) + h)
    y = jnp.einsum("ok,rkl->rol", p["w5a"], h)
    y = jnp.einsum("ok,rkl->rol", p["w5b"], y)
    return y.reshape(B, N, L)


if __name__ == "__main__":
    key = jax.random.PRNGKey(0)
    B, N, L = 2, 4, 16            # (batch, num_node, num_length)
    H = 32                        # hid_channel

    kx, kp = jax.random.split(key)
    x = jax.random.normal(kx, (B, N, L), jnp.float32)
    params = init_params(kp, H)

    out = rc_1d_forward(x, params)
    out = jax.block_until_ready(out)

    ref = rc_1d_reference(x, params)
    assert out.shape == (B, N, L)
    assert jnp.allclose(out, ref, rtol=2e-2, atol=2e-2), (
        f"max abs err = {jnp.max(jnp.abs(out - ref))}")

    print("KERNEL_OK")
</pallas_src>

<mosaic_0001>
module attributes {stable_mosaic.version = 11 : i64} {
  func.func @rc1d_kernel(%arg0: i32, %arg1: memref<1x128xf32, #tpu.memory_space<vmem>>, %arg2: memref<32x1xf32, #tpu.memory_space<vmem>>, %arg3: memref<32x96xbf16, #tpu.memory_space<vmem>>, %arg4: memref<32x1xf32, #tpu.memory_space<vmem>>, %arg5: memref<32x96xbf16, #tpu.memory_space<vmem>>, %arg6: memref<32x1xf32, #tpu.memory_space<vmem>>, %arg7: memref<32x96xbf16, #tpu.memory_space<vmem>>, %arg8: memref<32x1xf32, #tpu.memory_space<vmem>>, %arg9: memref<1x32xf32, #tpu.memory_space<vmem>>, %arg10: memref<1x128xf32, #tpu.memory_space<vmem>>) attributes {dimension_semantics = [#tpu.dimension_semantics<parallel>], iteration_bounds = array<i64: 1>, scalar_prefetch = 0 : i64, scratch_operands = 0 : i64, tpu.core_type = #tpu.core_type<tc>, window_params = [{transform_indices = @transform_0, window_bounds = array<i64: 1, 128>}, {pipeline_mode = #tpu.pipeline_mode<synchronous>, transform_indices = @transform_1, window_bounds = array<i64: 32, 1>}, {pipeline_mode = #tpu.pipeline_mode<synchronous>, transform_indices = @transform_2, window_bounds = array<i64: 32, 96>}, {pipeline_mode = #tpu.pipeline_mode<synchronous>, transform_indices = @transform_3, window_bounds = array<i64: 32, 1>}, {pipeline_mode = #tpu.pipeline_mode<synchronous>, transform_indices = @transform_4, window_bounds = array<i64: 32, 96>}, {pipeline_mode = #tpu.pipeline_mode<synchronous>, transform_indices = @transform_5, window_bounds = array<i64: 32, 1>}, {pipeline_mode = #tpu.pipeline_mode<synchronous>, transform_indices = @transform_6, window_bounds = array<i64: 32, 96>}, {pipeline_mode = #tpu.pipeline_mode<synchronous>, transform_indices = @transform_7, window_bounds = array<i64: 32, 1>}, {pipeline_mode = #tpu.pipeline_mode<synchronous>, transform_indices = @transform_8, window_bounds = array<i64: 1, 32>}, {transform_indices = @transform_9, window_bounds = array<i64: 1, 128>}]} {
    %c0 = arith.constant 0 : index
    %c0_0 = arith.constant 0 : index
    %0 = vector.load %arg1[%c0, %c0_0] : memref<1x128xf32, #tpu.memory_space<vmem>>, vector<1x128xf32>
    %1 = tpu.iota {dimensions = array<i32: 1>} : vector<1x128xi32>
    %c16_i32 = arith.constant 16 : i32
    %c0_i32 = arith.constant 0 : i32
    %2 = arith.cmpi eq, %c16_i32, %c0_i32 : i32
    %c1_i32 = arith.constant 1 : i32
    %3 = arith.select %2, %c1_i32, %c16_i32 : i32
    %4 = vector.broadcast %3 : i32 to vector<1x128xi32>
    %5 = arith.remsi %1, %4 : vector<1x128xi32>
    %c0_i32_1 = arith.constant 0 : i32
    %6 = vector.broadcast %c0_i32_1 : i32 to vector<1x128xi32>
    %7 = arith.cmpi ne, %5, %6 : vector<1x128xi32>
    %c0_i32_2 = arith.constant 0 : i32
    %8 = vector.broadcast %c0_i32_2 : i32 to vector<1x128xi32>
    %9 = arith.cmpi slt, %5, %8 : vector<1x128xi32>
    %c0_i32_3 = arith.constant 0 : i32
    %10 = arith.cmpi slt, %3, %c0_i32_3 : i32
    %11 = vector.broadcast %10 : i1 to vector<1x128xi1>
    %12 = vector.broadcast %11 : vector<1x128xi1> to vector<1x128xi1>
    %13 = arith.xori %9, %12 : vector<1x128xi1>
    %14 = arith.andi %13, %7 : vector<1x128xi1>
    %15 = vector.broadcast %3 : i32 to vector<1x128xi32>
    %16 = arith.addi %5, %15 : vector<1x128xi32>
    %17 = arith.select %14, %16, %5 : vector<1x128xi1>, vector<1x128xi32>
    %c0_i32_4 = arith.constant 0 : i32
    %18 = vector.broadcast %c0_i32_4 : i32 to vector<1x128xi32>
    %19 = arith.cmpi eq, %17, %18 : vector<1x128xi32>
    %c15_i32 = arith.constant 15 : i32
    %20 = vector.broadcast %c15_i32 : i32 to vector<1x128xi32>
    %21 = arith.cmpi eq, %17, %20 : vector<1x128xi32>
    %c0_5 = arith.constant 0 : index
    %c0_6 = arith.constant 0 : index
    %22 = vector.load %arg2[%c0_5, %c0_6] : memref<32x1xf32, #tpu.memory_space<vmem>>, vector<32x1xf32>
    %23 = vector.broadcast %22 : vector<32x1xf32> to vector<32x128xf32>
    %24 = vector.broadcast %0 : vector<1x128xf32> to vector<32x128xf32>
    %25 = arith.mulf %23, %24 : vector<32x128xf32>
    %26 = vector.extract_strided_slice %25 {offsets = [0, 127], sizes = [32, 1], strides = [1, 1]} : vector<32x128xf32> to vector<32x1xf32>
    %27 = vector.extract_strided_slice %25 {offsets = [0, 0], sizes = [32, 127], strides = [1, 1]} : vector<32x128xf32> to vector<32x127xf32>
    %28 = tpu.concatenate %26, %27 in 1 : vector<32x1xf32>, vector<32x127xf32> -> vector<32x128xf32>
    %29 = vector.shape_cast %19 : vector<1x128xi1> to vector<1x128xi1>
    %30 = vector.broadcast %29 : vector<1x128xi1> to vector<32x128xi1>
    %31 = arith.select %30, %25, %28 : vector<32x128xi1>, vector<32x128xf32>
    %32 = vector.extract_strided_slice %25 {offsets = [0, 1], sizes = [32, 127], strides = [1, 1]} : vector<32x128xf32> to vector<32x127xf32>
    %33 = vector.extract_strided_slice %25 {offsets = [0, 0], sizes = [32, 1], strides = [1, 1]} : vector<32x128xf32> to vector<32x1xf32>
    %34 = tpu.concatenate %32, %33 in 1 : vector<32x127xf32>, vector<32x1xf32> -> vector<32x128xf32>
    %35 = vector.shape_cast %21 : vector<1x128xi1> to vector<1x128xi1>
    %36 = vector.broadcast %35 : vector<1x128xi1> to vector<32x128xi1>
    %37 = arith.select %36, %25, %34 : vector<32x128xi1>, vector<32x128xf32>
    %38 = arith.truncf %31 : vector<32x128xf32> to vector<32x128xbf16>
    %39 = arith.truncf %25 : vector<32x128xf32> to vector<32x128xbf16>
    %40 = arith.truncf %37 : vector<32x128xf32> to vector<32x128xbf16>
    %41 = tpu.concatenate %38, %39, %40 in 0 : vector<32x128xbf16>, vector<32x128xbf16>, vector<32x128xbf16> -> vector<96x128xbf16>
    %c0_7 = arith.constant 0 : index
    %c0_8 = arith.constant 0 : index
    %42 = vector.load %arg3[%c0_7, %c0_8] : memref<32x96xbf16, #tpu.memory_space<vmem>>, vector<32x96xbf16>
    %cst = arith.constant dense<0.000000e+00> : vector<32x128xf32>
    %43 = tpu.matmul %42, %41, %cst {dimension_numbers = #tpu.dot_dimension_numbers<[1], [0], [0], [1], [0, 0, 1, 1], [], []>} : vector<32x96xbf16>, vector<96x128xbf16>, vector<32x128xf32> -> vector<32x128xf32>
    %c0_9 = arith.constant 0 : index
    %c0_10 = arith.constant 0 : index
    %44 = vector.load %arg4[%c0_9, %c0_10] : memref<32x1xf32, #tpu.memory_space<vmem>>, vector<32x1xf32>
    %45 = vector.broadcast %44 : vector<32x1xf32> to vector<32x128xf32>
    %46 = arith.addf %43, %45 : vector<32x128xf32>
    %47 = arith.addf %46, %25 : vector<32x128xf32>
    %cst_11 = arith.constant 0.000000e+00 : f32
    %48 = vector.broadcast %cst_11 : f32 to vector<32x128xf32>
    %49 = arith.maximumf %47, %48 : vector<32x128xf32>
    %50 = vector.extract_strided_slice %49 {offsets = [0, 127], sizes = [32, 1], strides = [1, 1]} : vector<32x128xf32> to vector<32x1xf32>
    %51 = vector.extract_strided_slice %49 {offsets = [0, 0], sizes = [32, 127], strides = [1, 1]} : vector<32x128xf32> to vector<32x127xf32>
    %52 = tpu.concatenate %50, %51 in 1 : vector<32x1xf32>, vector<32x127xf32> -> vector<32x128xf32>
    %53 = vector.shape_cast %19 : vector<1x128xi1> to vector<1x128xi1>
    %54 = vector.broadcast %53 : vector<1x128xi1> to vector<32x128xi1>
    %55 = arith.select %54, %49, %52 : vector<32x128xi1>, vector<32x128xf32>
    %56 = vector.extract_strided_slice %49 {offsets = [0, 1], sizes = [32, 127], strides = [1, 1]} : vector<32x128xf32> to vector<32x127xf32>
    %57 = vector.extract_strided_slice %49 {offsets = [0, 0], sizes = [32, 1], strides = [1, 1]} : vector<32x128xf32> to vector<32x1xf32>
    %58 = tpu.concatenate %56, %57 in 1 : vector<32x127xf32>, vector<32x1xf32> -> vector<32x128xf32>
    %59 = vector.shape_cast %21 : vector<1x128xi1> to vector<1x128xi1>
    %60 = vector.broadcast %59 : vector<1x128xi1> to vector<32x128xi1>
    %61 = arith.select %60, %49, %58 : vector<32x128xi1>, vector<32x128xf32>
    %62 = arith.truncf %55 : vector<32x128xf32> to vector<32x128xbf16>
    %63 = arith.truncf %49 : vector<32x128xf32> to vector<32x128xbf16>
    %64 = arith.truncf %61 : vector<32x128xf32> to vector<32x128xbf16>
    %65 = tpu.concatenate %62, %63, %64 in 0 : vector<32x128xbf16>, vector<32x128xbf16>, vector<32x128xbf16> -> vector<96x128xbf16>
    %c0_12 = arith.constant 0 : index
    %c0_13 = arith.constant 0 : index
    %66 = vector.load %arg5[%c0_12, %c0_13] : memref<32x96xbf16, #tpu.memory_space<vmem>>, vector<32x96xbf16>
    %cst_14 = arith.constant dense<0.000000e+00> : vector<32x128xf32>
    %67 = tpu.matmul %66, %65, %cst_14 {dimension_numbers = #tpu.dot_dimension_numbers<[1], [0], [0], [1], [0, 0, 1, 1], [], []>} : vector<32x96xbf16>, vector<96x128xbf16>, vector<32x128xf32> -> vector<32x128xf32>
    %c0_15 = arith.constant 0 : index
    %c0_16 = arith.constant 0 : index
    %68 = vector.load %arg6[%c0_15, %c0_16] : memref<32x1xf32, #tpu.memory_space<vmem>>, vector<32x1xf32>
    %69 = vector.broadcast %68 : vector<32x1xf32> to vector<32x128xf32>
    %70 = arith.addf %67, %69 : vector<32x128xf32>
    %71 = arith.addf %70, %49 : vector<32x128xf32>
    %cst_17 = arith.constant 0.000000e+00 : f32
    %72 = vector.broadcast %cst_17 : f32 to vector<32x128xf32>
    %73 = arith.maximumf %71, %72 : vector<32x128xf32>
    %74 = vector.extract_strided_slice %73 {offsets = [0, 127], sizes = [32, 1], strides = [1, 1]} : vector<32x128xf32> to vector<32x1xf32>
    %75 = vector.extract_strided_slice %73 {offsets = [0, 0], sizes = [32, 127], strides = [1, 1]} : vector<32x128xf32> to vector<32x127xf32>
    %76 = tpu.concatenate %74, %75 in 1 : vector<32x1xf32>, vector<32x127xf32> -> vector<32x128xf32>
    %77 = vector.shape_cast %19 : vector<1x128xi1> to vector<1x128xi1>
    %78 = vector.broadcast %77 : vector<1x128xi1> to vector<32x128xi1>
    %79 = arith.select %78, %73, %76 : vector<32x128xi1>, vector<32x128xf32>
    %80 = vector.extract_strided_slice %73 {offsets = [0, 1], sizes = [32, 127], strides = [1, 1]} : vector<32x128xf32> to vector<32x127xf32>
    %81 = vector.extract_strided_slice %73 {offsets = [0, 0], sizes = [32, 1], strides = [1, 1]} : vector<32x128xf32> to vector<32x1xf32>
    %82 = tpu.concatenate %80, %81 in 1 : vector<32x127xf32>, vector<32x1xf32> -> vector<32x128xf32>
    %83 = vector.shape_cast %21 : vector<1x128xi1> to vector<1x128xi1>
    %84 = vector.broadcast %83 : vector<1x128xi1> to vector<32x128xi1>
    %85 = arith.select %84, %73, %82 : vector<32x128xi1>, vector<32x128xf32>
    %86 = arith.truncf %79 : vector<32x128xf32> to vector<32x128xbf16>
    %87 = arith.truncf %73 : vector<32x128xf32> to vector<32x128xbf16>
    %88 = arith.truncf %85 : vector<32x128xf32> to vector<32x128xbf16>
    %89 = tpu.concatenate %86, %87, %88 in 0 : vector<32x128xbf16>, vector<32x128xbf16>, vector<32x128xbf16> -> vector<96x128xbf16>
    %c0_18 = arith.constant 0 : index
    %c0_19 = arith.constant 0 : index
    %90 = vector.load %arg7[%c0_18, %c0_19] : memref<32x96xbf16, #tpu.memory_space<vmem>>, vector<32x96xbf16>
    %cst_20 = arith.constant dense<0.000000e+00> : vector<32x128xf32>
    %91 = tpu.matmul %90, %89, %cst_20 {dimension_numbers = #tpu.dot_dimension_numbers<[1], [0], [0], [1], [0, 0, 1, 1], [], []>} : vector<32x96xbf16>, vector<96x128xbf16>, vector<32x128xf32> -> vector<32x128xf32>
    %c0_21 = arith.constant 0 : index
    %c0_22 = arith.constant 0 : index
    %92 = vector.load %arg8[%c0_21, %c0_22] : memref<32x1xf32, #tpu.memory_space<vmem>>, vector<32x1xf32>
    %93 = vector.broadcast %92 : vector<32x1xf32> to vector<32x128xf32>
    %94 = arith.addf %91, %93 : vector<32x128xf32>
    %95 = arith.addf %94, %73 : vector<32x128xf32>
    %cst_23 = arith.constant 0.000000e+00 : f32
    %96 = vector.broadcast %cst_23 : f32 to vector<32x128xf32>
    %97 = arith.maximumf %95, %96 : vector<32x128xf32>
    %c0_24 = arith.constant 0 : index
    %c0_25 = arith.constant 0 : index
    %98 = vector.load %arg9[%c0_24, %c0_25] : memref<1x32xf32, #tpu.memory_space<vmem>>, vector<1x32xf32>
    %cst_26 = arith.constant dense<0.000000e+00> : vector<1x128xf32>
    %99 = tpu.matmul %98, %97, %cst_26 {dimension_numbers = #tpu.dot_dimension_numbers<[1], [0], [0], [1], [0, 0, 1, 1], [], []>} : vector<1x32xf32>, vector<32x128xf32>, vector<1x128xf32> -> vector<1x128xf32>
    %c0_27 = arith.constant 0 : index
    %c0_28 = arith.constant 0 : index
    %100 = vector.load %arg10[%c0_27, %c0_28] : memref<1x128xf32, #tpu.memory_space<vmem>>, vector<1x128xf32>
    tpu.vector_store %arg10[%c0_27, %c0_28], %99 {strides = array<i32>} : memref<1x128xf32, #tpu.memory_space<vmem>>, vector<1x128xf32>,
    return
  }
  func.func @transform_0(%arg0: i32) -> (i32, i32) {
    %c0_i32 = arith.constant 0 : i32
    %c0_i32_0 = arith.constant 0 : i32
    return %arg0, %c0_i32 : i32, i32
  }
  func.func @transform_1(%arg0: i32) -> (i32, i32) {
    %c0_i32 = arith.constant 0 : i32
    %c0_i32_0 = arith.constant 0 : i32
    %c0_i32_1 = arith.constant 0 : i32
    return %c0_i32, %c0_i32_0 : i32, i32
  }
  func.func @transform_2(%arg0: i32) -> (i32, i32) {
    %c0_i32 = arith.constant 0 : i32
    %c0_i32_0 = arith.constant 0 : i32
    %c0_i32_1 = arith.constant 0 : i32
    return %c0_i32, %c0_i32_0 : i32, i32
  }
  func.func @transform_3(%arg0: i32) -> (i32, i32) {
    %c0_i32 = arith.constant 0 : i32
    %c0_i32_0 = arith.constant 0 : i32
    %c0_i32_1 = arith.constant 0 : i32
    return %c0_i32, %c0_i32_0 : i32, i32
  }
  func.func @transform_4(%arg0: i32) -> (i32, i32) {
    %c0_i32 = arith.constant 0 : i32
    %c0_i32_0 = arith.constant 0 : i32
    %c0_i32_1 = arith.constant 0 : i32
    return %c0_i32, %c0_i32_0 : i32, i32
  }
  func.func @transform_5(%arg0: i32) -> (i32, i32) {
    %c0_i32 = arith.constant 0 : i32
    %c0_i32_0 = arith.constant 0 : i32
    %c0_i32_1 = arith.constant 0 : i32
    return %c0_i32, %c0_i32_0 : i32, i32
  }
  func.func @transform_6(%arg0: i32) -> (i32, i32) {
    %c0_i32 = arith.constant 0 : i32
    %c0_i32_0 = arith.constant 0 : i32
    %c0_i32_1 = arith.constant 0 : i32
    return %c0_i32, %c0_i32_0 : i32, i32
  }
  func.func @transform_7(%arg0: i32) -> (i32, i32) {
    %c0_i32 = arith.constant 0 : i32
    %c0_i32_0 = arith.constant 0 : i32
    %c0_i32_1 = arith.constant 0 : i32
    return %c0_i32, %c0_i32_0 : i32, i32
  }
  func.func @transform_8(%arg0: i32) -> (i32, i32) {
    %c0_i32 = arith.constant 0 : i32
    %c0_i32_0 = arith.constant 0 : i32
    %c0_i32_1 = arith.constant 0 : i32
    return %c0_i32, %c0_i32_0 : i32, i32
  }
  func.func @transform_9(%arg0: i32) -> (i32, i32) {
    %c0_i32 = arith.constant 0 : i32
    %c0_i32_0 = arith.constant 0 : i32
    return %arg0, %c0_i32 : i32, i32
  }
}

</mosaic_0001>

<llo_original>
// kernel: rc_1d_forward.1
$region0: #{rc_1d_forward.1}
  #allocation0 [shape = 'u32[]', space=smem, size = 0x4, offset = 0x4, fixed_abs, tag = 'smem constant byte address 0x4 - core index']
  #allocation1 [shape = 'u32[144,128]{1,0:T(1,128)}', space=vmem, size = 0x12000, scoped, tag = 'internal scratch']
  %s0 = inlined_call_operand.vmem [shape: f32[1,128], index: 0, kind: input, shape index: {}]
  %s1 = inlined_call_operand.vmem [shape: f32[32,1], index: 1, kind: input, shape index: {}]
  %s2 = inlined_call_operand.vmem [shape: bf16[32,96], index: 2, kind: input, shape index: {}]
  %s3 = inlined_call_operand.vmem [shape: f32[32,1], index: 3, kind: input, shape index: {}]
  %s4 = inlined_call_operand.vmem [shape: bf16[32,96], index: 4, kind: input, shape index: {}]
  %s5 = inlined_call_operand.vmem [shape: f32[32,1], index: 5, kind: input, shape index: {}]
  %s6 = inlined_call_operand.vmem [shape: bf16[32,96], index: 6, kind: input, shape index: {}]
  %s7 = inlined_call_operand.vmem [shape: f32[32,1], index: 7, kind: input, shape index: {}]
  %s8 = inlined_call_operand.vmem [shape: f32[1,32], index: 8, kind: input, shape index: {}]
  %s9 = inlined_call_operand.vmem [shape: f32[1,128], index: 9, kind: output, shape index: {}]
  %s10 = sld [smem:[#allocation0]]
  $region46: #{rc_1d_forward.1} parent=0
    _
  %s12 = ssub.s32 1, %s10
  %s13 = scalar_select 0, %s12, %s10
  // Predicated region
  $region2: #{rc_1d_forward.1} parent=0 // pred_check
    _
  $region3: #{rc_1d_forward.1} parent=0 // pred_check_branch
    %15 = sbr.rel (0) target = $region5
  $region4: #{rc_1d_forward.1} parent=0 // pred_region
    _
  $region5: #{rc_1d_forward.1} parent=0 // pred_fallthru
    _
  // Predicated region
  $region6: #{rc_1d_forward.1} parent=0 // pred_check
    _
  $region7: #{rc_1d_forward.1} parent=0 // pred_check_branch
    %17 = sbr.rel (0) target = $region9
  $region8: #{rc_1d_forward.1} parent=0 // pred_region
    _
  $region9: #{rc_1d_forward.1} parent=0 // pred_fallthru
    _
  // Predicated region
  $region10: #{rc_1d_forward.1} parent=0 // pred_check
    _
  $region11: #{rc_1d_forward.1} parent=0 // pred_check_branch
    %19 = sbr.rel (0) target = $region13
  $region12: #{rc_1d_forward.1} parent=0 // pred_region
    _
  $region13: #{rc_1d_forward.1} parent=0 // pred_fallthru
    _
  // Predicated region
  $region14: #{rc_1d_forward.1} parent=0 // pred_check
    _
  $region15: #{rc_1d_forward.1} parent=0 // pred_check_branch
    %21 = sbr.rel (0) target = $region17
  $region16: #{rc_1d_forward.1} parent=0 // pred_region
    _
  $region17: #{rc_1d_forward.1} parent=0 // pred_fallthru
    _
  // Predicated region
  $region18: #{rc_1d_forward.1} parent=0 // pred_check
    _
  $region19: #{rc_1d_forward.1} parent=0 // pred_check_branch
    %23 = sbr.rel (0) target = $region21
  $region20: #{rc_1d_forward.1} parent=0 // pred_region
    _
  $region21: #{rc_1d_forward.1} parent=0 // pred_fallthru
    _
  // Predicated region
  $region22: #{rc_1d_forward.1} parent=0 // pred_check
    _
  $region23: #{rc_1d_forward.1} parent=0 // pred_check_branch
    %25 = sbr.rel (0) target = $region25
  $region24: #{rc_1d_forward.1} parent=0 // pred_region
    _
  $region25: #{rc_1d_forward.1} parent=0 // pred_fallthru
    _
  // Predicated region
  $region26: #{rc_1d_forward.1} parent=0 // pred_check
    _
  $region27: #{rc_1d_forward.1} parent=0 // pred_check_branch
    %27 = sbr.rel (0) target = $region29
  $region28: #{rc_1d_forward.1} parent=0 // pred_region
    _
  $region29: #{rc_1d_forward.1} parent=0 // pred_fallthru
    _
  // Predicated region
  $region30: #{rc_1d_forward.1} parent=0 // pred_check
    _
  $region31: #{rc_1d_forward.1} parent=0 // pred_check_branch
    %29 = sbr.rel (0) target = $region33
  $region32: #{rc_1d_forward.1} parent=0 // pred_region
    _
  $region33: #{rc_1d_forward.1} parent=0 // pred_fallthru
    _
  // Predicated region
  $region34: #{rc_1d_forward.1} parent=0 // pred_check
    _
  $region35: #{rc_1d_forward.1} parent=0 // pred_check_branch
    %31 = sbr.rel (0) target = $region37
  $region36: #{rc_1d_forward.1} parent=0 // pred_region
    _
  $region37: #{rc_1d_forward.1} parent=0 // pred_fallthru
    _
  %v33 = vld [vmem:[%s0] sm:$0x1]
  %v34 = vlaneseq
  %v35 = vand.u32 %v34, 127
  %vm36 = vcmp.lt.s32.totalorder %v35, 0
  %v37 = vsub.s32 0, %v35
  %v38 = vsel %vm36, %v37, %v35
  %v39 = vshrl.u32 %v38, 4
  %v40 = vand.u32 %v38, 15
  %v41 = vsub.s32 0, %v40
  %v42 = vsel %vm36, %v41, %v40
  %vm43 = vcmp.ne.s32.totalorder %v42, 0
  %vm44 = vcmp.lt.s32.totalorder %v42, 0
  %vm45 = vmand %vm44, %vm43
  %v46 = vadd.s32 %v42, 16
  %v47 = vsel %vm45, %v46, %v42
  %vm48 = vcmp.eq.s32.totalorder %v47, 0
  %vm49 = vcmp.eq.s32.totalorder %v47, 15
  %v50 = vld [vmem:[%s1] sm:$0xff]
  %v51 = vld [vmem:[%s1 + $0x8] sm:$0xff]
  %v52 = vld [vmem:[%s1 + $0x10] sm:$0xff]
  %v53 = vld [vmem:[%s1 + $0x18] sm:$0xff]
  %55 = vset.pattern.permute.xlu0 0
  %56 = vperm.xlu0 %55, %v50
  %v57 = vpop.permute.xlu0 %56
  %60 = vset.pattern.permute.xlu0 0
  %61 = vperm.xlu0 %60, %v51
  %v62 = vpop.permute.xlu0 %61
  %65 = vset.pattern.permute.xlu0 0
  %66 = vperm.xlu0 %65, %v52
  %v67 = vpop.permute.xlu0 %66
  %70 = vset.pattern.permute.xlu0 0
  %71 = vperm.xlu0 %70, %v53
  %v72 = vpop.permute.xlu0 %71
  %v75 = vlaneseq
  %v76 = vshrl.u32 %v75, 7
  %v77 = vsub.s32 0, %v76
  %v78 = vrot.slane %v33, %v77
  %v80 = vmul.f32 %v57, %v78
  %v81 = vmul.f32 %v62, %v78
  %v82 = vmul.f32 %v67, %v78
  %v83 = vmul.f32 %v72, %v78
  %88 = vrot.lane.b32.xlu0 %v80, 1
  %v89 = vpop.permute.xlu0 %88
  %90 = vrot.lane.b32.xlu0 %v81, 1
  %v91 = vpop.permute.xlu0 %90
  %92 = vrot.lane.b32.xlu0 %v82, 1
  %v93 = vpop.permute.xlu0 %92
  %94 = vrot.lane.b32.xlu0 %v83, 1
  %v95 = vpop.permute.xlu0 %94
  %v100 = vsel %vm48, 1, 0
  %vm101 = vcmp.eq.s32.totalorder %v100, 1
  %v102 = vsel %vm101, %v80, %v89
  %v103 = vsel %vm101, %v81, %v91
  %v104 = vsel %vm101, %v82, %v93
  %v105 = vsel %vm101, %v83, %v95
  %106 = vrot.lane.b32.xlu0 %v80, 127
  %v107 = vpop.permute.xlu0 %106
  %108 = vrot.lane.b32.xlu0 %v81, 127
  %v109 = vpop.permute.xlu0 %108
  %110 = vrot.lane.b32.xlu0 %v82, 127
  %v111 = vpop.permute.xlu0 %110
  %112 = vrot.lane.b32.xlu0 %v83, 127
  %v113 = vpop.permute.xlu0 %112
  %v118 = vsel %vm49, 1, 0
  %vm119 = vcmp.eq.s32.totalorder %v118, 1
  %v120 = vsel %vm119, %v80, %v107
  %v121 = vsel %vm119, %v81, %v109
  %v122 = vsel %vm119, %v82, %v111
  %v123 = vsel %vm119, %v83, %v113
  %v124 = vpack.c.bf16 %v103, %v102
  %v125 = vpack.c.bf16 %v105, %v104
  %v126 = vpack.c.bf16 %v81, %v80
  %v127 = vpack.c.bf16 %v83, %v82
  %v128 = vpack.c.bf16 %v121, %v120
  %v129 = vpack.c.bf16 %v123, %v122
  %v130 = vld [vmem:[%s2] sm:$0xf]
  %v131 = vld [vmem:[%s2 + $0x4] sm:$0xf]
  %v132 = vld [vmem:[%s2 + $0x8] sm:$0xf]
  %v133 = vld [vmem:[%s2 + $0xc] sm:$0xf]
  %v134 = vld [vmem:[%s3] sm:$0xff]
  %v135 = vld [vmem:[%s3 + $0x8] sm:$0xff]
  %v136 = vld [vmem:[%s3 + $0x10] sm:$0xff]
  %v137 = vld [vmem:[%s3 + $0x18] sm:$0xff]
  %139 = vset.pattern.permute.xlu0 0
  %140 = vperm.xlu0 %139, %v134
  %v141 = vpop.permute.xlu0 %140
  %144 = vset.pattern.permute.xlu0 0
  %145 = vperm.xlu0 %144, %v135
  %v146 = vpop.permute.xlu0 %145
  %149 = vset.pattern.permute.xlu0 0
  %150 = vperm.xlu0 %149, %v136
  %v151 = vpop.permute.xlu0 %150
  %154 = vset.pattern.permute.xlu0 0
  %155 = vperm.xlu0 %154, %v137
  %v156 = vpop.permute.xlu0 %155
  %v162 = vunpack.c.l.b16 %v130
  %v163 = vunpack.c.l.b16 %v131
  %v164 = vunpack.c.l.b16 %v132
  %v165 = vunpack.c.l.b16 %v133
  %v166 = vpack.c.b16 %v163, %v162
  %v167 = vpack.c.b16 %v165, %v164
  %vm168 = vcmask 785408
  %v170 = vsel %vm168, %v166, 0
  %v173 = vsel %vm168, %v167, 0
  %175 = vmatprep.subr.bf16.mxu0 0
  %176 = vmatpush1.bf16.msra.mxu0 %v124
  %177 = vmatprep.subr.bf16.mxu0 0
  %178 = vmatpush1.bf16.msra.mxu0 %v125
  %179 = vmatprep.subr.bf16.mxu0 0
  %180 = vmatpush1.bf16.msra.mxu0 %v126
  %181 = vmatprep.subr.bf16.mxu0 0
  %182 = vmatpush1.bf16.msra.mxu0 %v127
  %183 = vmatprep.subr.bf16.mxu0 0
  %184 = vmatpush1.bf16.msra.mxu0 %v128
  %185 = vmatprep.subr.bf16.mxu0 0
  %186 = vmatpush1.bf16.msra.mxu0 %v129
  %187 = vmatprep.subr.bf16.mxu0 0
  %188 = vmatpush1.bf16.msra.mxu0 0
  %189 = vmatprep.subr.bf16.mxu0 0
  %190 = vmatpush1.bf16.msra.mxu0 0
  %191 = vmatprep.subr.bf16.mxu0 0
  %192 = vmatpush1.bf16.msra.mxu0 0
  %193 = vmatprep.subr.bf16.mxu0 0
  %194 = vmatpush1.bf16.msra.mxu0 0
  %195 = vmatprep.subr.bf16.mxu0 0
  %196 = vmatpush1.bf16.msra.mxu0 0
  %197 = vmatprep.subr.bf16.mxu0 0
  %198 = vmatpush1.bf16.msra.mxu0 0
  %199 = vmatprep.subr.bf16.mxu0 0
  %200 = vmatpush1.bf16.msra.mxu0 0
  %201 = vmatprep.subr.bf16.mxu0 0
  %202 = vmatpush1.bf16.msra.mxu0 0
  %203 = vmatprep.subr.bf16.mxu0 0
  %204 = vmatpush1.bf16.msra.mxu0 0
  %205 = vmatprep.subr.bf16.mxu0 0
  %206 = vmatpush1.bf16.msra.mxu0 0
  %207 = vmatprep.mubr.bf16.mxu0 0
  %208 = vmatmul.mubr.bf16.gmra.mrb[0].mxu0 %v170
  %v209 = vpop.f32.mrb[0].mxu0
  %v210 = vadd.f32 %v141, %v209
  %v211 = vpop.f32.mrb[0].mxu0
  %v212 = vpop.f32.mrb[0].mxu0
  %v213 = vadd.f32 %v146, %v212
  %v214 = vpop.f32.mrb[0].mxu0
  %215 = vmatprep.mubr.bf16.mxu0 0
  %216 = vmatmul.mubr.bf16.gmra.mrb[0].mxu0 %v173
  %v217 = vpop.f32.mrb[0].mxu0
  %v218 = vadd.f32 %v151, %v217
  %v219 = vpop.f32.mrb[0].mxu0
  %v220 = vpop.f32.mrb[0].mxu0
  %v221 = vadd.f32 %v156, %v220
  %v222 = vpop.f32.mrb[0].mxu0
  %223 = vdwg.mxu0
  %v224 = vadd.f32 %v210, %v80
  %v225 = vadd.f32 %v213, %v81
  %v226 = vadd.f32 %v218, %v82
  %v227 = vadd.f32 %v221, %v83
  %v228 = vmax.f32 %v224, 0.0
  %v229 = vmax.f32 %v225, 0.0
  %v230 = vmax.f32 %v226, 0.0
  %v231 = vmax.f32 %v227, 0.0
  %236 = vrot.lane.b32.xlu0 %v228, 1
  %v237 = vpop.permute.xlu0 %236
  %238 = vrot.lane.b32.xlu0 %v229, 1
  %v239 = vpop.permute.xlu0 %238
  %240 = vrot.lane.b32.xlu0 %v230, 1
  %v241 = vpop.permute.xlu0 %240
  %242 = vrot.lane.b32.xlu0 %v231, 1
  %v243 = vpop.permute.xlu0 %242
  %v248 = vsel %vm101, %v228, %v237
  %v249 = vsel %vm101, %v229, %v239
  %v250 = vsel %vm101, %v230, %v241
  %v251 = vsel %vm101, %v231, %v243
  %252 = vrot.lane.b32.xlu0 %v228, 127
  %v253 = vpop.permute.xlu0 %252
  %254 = vrot.lane.b32.xlu0 %v229, 127
  %v255 = vpop.permute.xlu0 %254
  %256 = vrot.lane.b32.xlu0 %v230, 127
  %v257 = vpop.permute.xlu0 %256
  %258 = vrot.lane.b32.xlu0 %v231, 127
  %v259 = vpop.permute.xlu0 %258
  %v264 = vsel %vm119, %v228, %v253
  %v265 = vsel %vm119, %v229, %v255
  %v266 = vsel %vm119, %v230, %v257
  %v267 = vsel %vm119, %v231, %v259
  %v268 = vpack.c.bf16 %v249, %v248
  %v269 = vpack.c.bf16 %v251, %v250
  %v270 = vpack.c.bf16 %v229, %v228
  %v271 = vpack.c.bf16 %v231, %v230
  %v272 = vpack.c.bf16 %v265, %v264
  %v273 = vpack.c.bf16 %v267, %v266
  %v274 = vld [vmem:[%s4] sm:$0xf]
  %v275 = vld [vmem:[%s4 + $0x4] sm:$0xf]
  %v276 = vld [vmem:[%s4 + $0x8] sm:$0xf]
  %v277 = vld [vmem:[%s4 + $0xc] sm:$0xf]
  %v278 = vld [vmem:[%s5] sm:$0xff]
  %v279 = vld [vmem:[%s5 + $0x8] sm:$0xff]
  %v280 = vld [vmem:[%s5 + $0x10] sm:$0xff]
  %v281 = vld [vmem:[%s5 + $0x18] sm:$0xff]
  %283 = vset.pattern.permute.xlu0 0
  %284 = vperm.xlu0 %283, %v278
  %v285 = vpop.permute.xlu0 %284
  %288 = vset.pattern.permute.xlu0 0
  %289 = vperm.xlu0 %288, %v279
  %v290 = vpop.permute.xlu0 %289
  %293 = vset.pattern.permute.xlu0 0
  %294 = vperm.xlu0 %293, %v280
  %v295 = vpop.permute.xlu0 %294
  %298 = vset.pattern.permute.xlu0 0
  %299 = vperm.xlu0 %298, %v281
  %v300 = vpop.permute.xlu0 %299
  %v306 = vunpack.c.l.b16 %v274
  %v307 = vunpack.c.l.b16 %v275
  %v308 = vunpack.c.l.b16 %v276
  %v309 = vunpack.c.l.b16 %v277
  %v310 = vpack.c.b16 %v307, %v306
  %v311 = vpack.c.b16 %v309, %v308
  %v313 = vsel %vm168, %v310, 0
  %v316 = vsel %vm168, %v311, 0
  %318 = vmatprep.subr.bf16.mxu0 0
  %319 = vmatpush1.bf16.msra.mxu0 %v268
  %320 = vmatprep.subr.bf16.mxu0 0
  %321 = vmatpush1.bf16.msra.mxu0 %v269
  %322 = vmatprep.subr.bf16.mxu0 0
  %323 = vmatpush1.bf16.msra.mxu0 %v270
  %324 = vmatprep.subr.bf16.mxu0 0
  %325 = vmatpush1.bf16.msra.mxu0 %v271
  %326 = vmatprep.subr.bf16.mxu0 0
  %327 = vmatpush1.bf16.msra.mxu0 %v272
  %328 = vmatprep.subr.bf16.mxu0 0
  %329 = vmatpush1.bf16.msra.mxu0 %v273
  %330 = vmatprep.subr.bf16.mxu0 0
  %331 = vmatpush1.bf16.msra.mxu0 0
  %332 = vmatprep.subr.bf16.mxu0 0
  %333 = vmatpush1.bf16.msra.mxu0 0
  %334 = vmatprep.subr.bf16.mxu0 0
  %335 = vmatpush1.bf16.msra.mxu0 0
  %336 = vmatprep.subr.bf16.mxu0 0
  %337 = vmatpush1.bf16.msra.mxu0 0
  %338 = vmatprep.subr.bf16.mxu0 0
  %339 = vmatpush1.bf16.msra.mxu0 0
  %340 = vmatprep.subr.bf16.mxu0 0
  %341 = vmatpush1.bf16.msra.mxu0 0
  %342 = vmatprep.subr.bf16.mxu0 0
  %343 = vmatpush1.bf16.msra.mxu0 0
  %344 = vmatprep.subr.bf16.mxu0 0
  %345 = vmatpush1.bf16.msra.mxu0 0
  %346 = vmatprep.subr.bf16.mxu0 0
  %347 = vmatpush1.bf16.msra.mxu0 0
  %348 = vmatprep.subr.bf16.mxu0 0
  %349 = vmatpush1.bf16.msra.mxu0 0
  %350 = vmatprep.mubr.bf16.mxu0 0
  %351 = vmatmul.mubr.bf16.gmra.mrb[0].mxu0 %v313
  %v352 = vpop.f32.mrb[0].mxu0
  %v353 = vadd.f32 %v285, %v352
  %v354 = vpop.f32.mrb[0].mxu0
  %v355 = vpop.f32.mrb[0].mxu0
  %v356 = vadd.f32 %v290, %v355
  %v357 = vpop.f32.mrb[0].mxu0
  %358 = vmatprep.mubr.bf16.mxu0 0
  %359 = vmatmul.mubr.bf16.gmra.mrb[0].mxu0 %v316
  %v360 = vpop.f32.mrb[0].mxu0
  %v361 = vadd.f32 %v295, %v360
  %v362 = vpop.f32.mrb[0].mxu0
  %v363 = vpop.f32.mrb[0].mxu0
  %v364 = vadd.f32 %v300, %v363
  %v365 = vpop.f32.mrb[0].mxu0
  %366 = vdwg.mxu0
  %v367 = vadd.f32 %v353, %v228
  %v368 = vadd.f32 %v356, %v229
  %v369 = vadd.f32 %v361, %v230
  %v370 = vadd.f32 %v364, %v231
  %v371 = vmax.f32 %v367, 0.0
  %v372 = vmax.f32 %v368, 0.0
  %v373 = vmax.f32 %v369, 0.0
  %v374 = vmax.f32 %v370, 0.0
  %379 = vrot.lane.b32.xlu0 %v371, 1
  %v380 = vpop.permute.xlu0 %379
  %381 = vrot.lane.b32.xlu0 %v372, 1
  %v382 = vpop.permute.xlu0 %381
  %383 = vrot.lane.b32.xlu0 %v373, 1
  %v384 = vpop.permute.xlu0 %383
  %385 = vrot.lane.b32.xlu0 %v374, 1
  %v386 = vpop.permute.xlu0 %385
  %v391 = vsel %vm101, %v371, %v380
  %v392 = vsel %vm101, %v372, %v382
  %v393 = vsel %vm101, %v373, %v384
  %v394 = vsel %vm101, %v374, %v386
  %395 = vrot.lane.b32.xlu0 %v371, 127
  %v396 = vpop.permute.xlu0 %395
  %397 = vrot.lane.b32.xlu0 %v372, 127
  %v398 = vpop.permute.xlu0 %397
  %399 = vrot.lane.b32.xlu0 %v373, 127
  %v400 = vpop.permute.xlu0 %399
  %401 = vrot.lane.b32.xlu0 %v374, 127
  %v402 = vpop.permute.xlu0 %401
  %v407 = vsel %vm119, %v371, %v396
  %v408 = vsel %vm119, %v372, %v398
  %v409 = vsel %vm119, %v373, %v400
  %v410 = vsel %vm119, %v374, %v402
  %v411 = vpack.c.bf16 %v392, %v391
  %v412 = vpack.c.bf16 %v394, %v393
  %v413 = vpack.c.bf16 %v372, %v371
  %v414 = vpack.c.bf16 %v374, %v373
  %v415 = vpack.c.bf16 %v408, %v407
  %v416 = vpack.c.bf16 %v410, %v409
  %v417 = vld [vmem:[%s6] sm:$0xf]
  %v418 = vld [vmem:[%s6 + $0x4] sm:$0xf]
  %v419 = vld [vmem:[%s6 + $0x8] sm:$0xf]
  %v420 = vld [vmem:[%s6 + $0xc] sm:$0xf]
  %v421 = vld [vmem:[%s7] sm:$0xff]
  %v422 = vld [vmem:[%s7 + $0x8] sm:$0xff]
  %v423 = vld [vmem:[%s7 + $0x10] sm:$0xff]
  %v424 = vld [vmem:[%s7 + $0x18] sm:$0xff]
  %426 = vset.pattern.permute.xlu0 0
  %427 = vperm.xlu0 %426, %v421
  %v428 = vpop.permute.xlu0 %427
  %431 = vset.pattern.permute.xlu0 0
  %432 = vperm.xlu0 %431, %v422
  %v433 = vpop.permute.xlu0 %432
  %436 = vset.pattern.permute.xlu0 0
  %437 = vperm.xlu0 %436, %v423
  %v438 = vpop.permute.xlu0 %437
  %441 = vset.pattern.permute.xlu0 0
  %442 = vperm.xlu0 %441, %v424
  %v443 = vpop.permute.xlu0 %442
  %v449 = vunpack.c.l.b16 %v417
  %v450 = vunpack.c.l.b16 %v418
  %v451 = vunpack.c.l.b16 %v419
  %v452 = vunpack.c.l.b16 %v420
  %v453 = vpack.c.b16 %v450, %v449
  %v454 = vpack.c.b16 %v452, %v451
  %v456 = vsel %vm168, %v453, 0
  %v459 = vsel %vm168, %v454, 0
  %461 = vmatprep.subr.bf16.mxu0 0
  %462 = vmatpush1.bf16.msra.mxu0 %v411
  %463 = vmatprep.subr.bf16.mxu0 0
  %464 = vmatpush1.bf16.msra.mxu0 %v412
  %465 = vmatprep.subr.bf16.mxu0 0
  %466 = vmatpush1.bf16.msra.mxu0 %v413
  %467 = vmatprep.subr.bf16.mxu0 0
  %468 = vmatpush1.bf16.msra.mxu0 %v414
  %469 = vmatprep.subr.bf16.mxu0 0
  %470 = vmatpush1.bf16.msra.mxu0 %v415
  %471 = vmatprep.subr.bf16.mxu0 0
  %472 = vmatpush1.bf16.msra.mxu0 %v416
  %473 = vmatprep.subr.bf16.mxu0 0
  %474 = vmatpush1.bf16.msra.mxu0 0
  %475 = vmatprep.subr.bf16.mxu0 0
  %476 = vmatpush1.bf16.msra.mxu0 0
  %477 = vmatprep.subr.bf16.mxu0 0
  %478 = vmatpush1.bf16.msra.mxu0 0
  %479 = vmatprep.subr.bf16.mxu0 0
  %480 = vmatpush1.bf16.msra.mxu0 0
  %481 = vmatprep.subr.bf16.mxu0 0
  %482 = vmatpush1.bf16.msra.mxu0 0
  %483 = vmatprep.subr.bf16.mxu0 0
  %484 = vmatpush1.bf16.msra.mxu0 0
  %485 = vmatprep.subr.bf16.mxu0 0
  %486 = vmatpush1.bf16.msra.mxu0 0
  %487 = vmatprep.subr.bf16.mxu0 0
  %488 = vmatpush1.bf16.msra.mxu0 0
  %489 = vmatprep.subr.bf16.mxu0 0
  %490 = vmatpush1.bf16.msra.mxu0 0
  %491 = vmatprep.subr.bf16.mxu0 0
  %492 = vmatpush1.bf16.msra.mxu0 0
  %493 = vmatprep.mubr.bf16.mxu0 0
  %494 = vmatmul.mubr.bf16.gmra.mrb[0].mxu0 %v456
  %v495 = vpop.f32.mrb[0].mxu0
  %v496 = vadd.f32 %v428, %v495
  %v497 = vpop.f32.mrb[0].mxu0
  %v498 = vpop.f32.mrb[0].mxu0
  %v499 = vadd.f32 %v433, %v498
  %v500 = vpop.f32.mrb[0].mxu0
  %501 = vmatprep.mubr.bf16.mxu0 0
  %502 = vmatmul.mubr.bf16.gmra.mrb[0].mxu0 %v459
  %v503 = vpop.f32.mrb[0].mxu0
  %v504 = vadd.f32 %v438, %v503
  %v505 = vpop.f32.mrb[0].mxu0
  %v506 = vpop.f32.mrb[0].mxu0
  %v507 = vadd.f32 %v443, %v506
  %v508 = vpop.f32.mrb[0].mxu0
  %509 = vdwg.mxu0
  %v510 = vadd.f32 %v496, %v371
  %v511 = vadd.f32 %v499, %v372
  %v512 = vadd.f32 %v504, %v373
  %v513 = vadd.f32 %v507, %v374
  %v514 = vmax.f32 %v510, 0.0
  %v515 = vmax.f32 %v511, 0.0
  %v516 = vmax.f32 %v512, 0.0
  %v517 = vmax.f32 %v513, 0.0
  %v518 = vld [vmem:[%s8] sm:$0x1]
  %vm519 = vcmask 261120
  %v521 = vsel %vm519, %v518, 0
  %523 = vmatprep.subr.mxu0 0.0
  %524 = vmatpush1.msra.mxu0 %v514
  %525 = vmatprep.subr.mxu0 0.0
  %526 = vmatpush1.msra.mxu0 %v515
  %527 = vmatprep.subr.mxu0 0.0
  %528 = vmatpush1.msra.mxu0 %v516
  %529 = vmatprep.subr.mxu0 0.0
  %530 = vmatpush1.msra.mxu0 %v517
  %531 = vmatprep.subr.mxu0 0.0
  %532 = vmatpush1.msra.mxu0 0.0
  %533 = vmatprep.subr.mxu0 0.0
  %534 = vmatpush1.msra.mxu0 0.0
  %535 = vmatprep.subr.mxu0 0.0
  %536 = vmatpush1.msra.mxu0 0.0
  %537 = vmatprep.subr.mxu0 0.0
  %538 = vmatpush1.msra.mxu0 0.0
  %539 = vmatprep.subr.mxu0 0.0
  %540 = vmatpush1.msra.mxu0 0.0
  %541 = vmatprep.subr.mxu0 0.0
  %542 = vmatpush1.msra.mxu0 0.0
  %543 = vmatprep.subr.mxu0 0.0
  %544 = vmatpush1.msra.mxu0 0.0
  %545 = vmatprep.subr.mxu0 0.0
  %546 = vmatpush1.msra.mxu0 0.0
  %547 = vmatprep.subr.mxu0 0.0
  %548 = vmatpush1.msra.mxu0 0.0
  %549 = vmatprep.subr.mxu0 0.0
  %550 = vmatpush1.msra.mxu0 0.0
  %551 = vmatprep.subr.mxu0 0.0
  %552 = vmatpush1.msra.mxu0 0.0
  %553 = vmatprep.subr.mxu0 0.0
  %554 = vmatpush1.msra.mxu0 0.0
  %555 = vmatprep.subr.mxu0 0.0
  %556 = vmatpush1.msra.mxu0 0.0
  %557 = vmatprep.subr.mxu0 0.0
  %558 = vmatpush1.msra.mxu0 0.0
  %559 = vmatprep.subr.mxu0 0.0
  %560 = vmatpush1.msra.mxu0 0.0
  %561 = vmatprep.subr.mxu0 0.0
  %562 = vmatpush1.msra.mxu0 0.0
  %563 = vmatprep.subr.mxu0 0.0
  %564 = vmatpush1.msra.mxu0 0.0
  %565 = vmatprep.subr.mxu0 0.0
  %566 = vmatpush1.msra.mxu0 0.0
  %567 = vmatprep.subr.mxu0 0.0
  %568 = vmatpush1.msra.mxu0 0.0
  %569 = vmatprep.subr.mxu0 0.0
  %570 = vmatpush1.msra.mxu0 0.0
  %571 = vmatprep.subr.mxu0 0.0
  %572 = vmatpush1.msra.mxu0 0.0
  %573 = vmatprep.subr.mxu0 0.0
  %574 = vmatpush1.msra.mxu0 0.0
  %575 = vmatprep.subr.mxu0 0.0
  %576 = vmatpush1.msra.mxu0 0.0
  %577 = vmatprep.subr.mxu0 0.0
  %578 = vmatpush1.msra.mxu0 0.0
  %579 = vmatprep.subr.mxu0 0.0
  %580 = vmatpush1.msra.mxu0 0.0
  %581 = vmatprep.subr.mxu0 0.0
  %582 = vmatpush1.msra.mxu0 0.0
  %583 = vmatprep.subr.mxu0 0.0
  %584 = vmatpush1.msra.mxu0 0.0
  %585 = vmatprep.subr.mxu0 0.0
  %586 = vmatpush1.msra.mxu0 0.0
  %587 = vmatprep.mubr.f32.mxu0 0.0
  %588 = vmatmul.mubr.f32.gmra.mrb[0].mxu0 %v521
  %v589 = vpop.f32.mrb[0].mxu0
  %v590 = vadd.f32 0.0, %v589
  %v591 = vpop.f32.mrb[0].mxu0
  %592 = vdwg.mxu0
  %593 = vst [vmem:[%s9] sm:$0x1] %v590
  // Predicated region
  $region38: #{rc_1d_forward.1} parent=0 // pred_check
    _
  $region39: #{rc_1d_forward.1} parent=0 // pred_check_branch
    %595 = sbr.rel (0) target = $region41
  $region40: #{rc_1d_forward.1} parent=0 // pred_region
    _
  $region41: #{rc_1d_forward.1} parent=0 // pred_fallthru
    _
  // Predicated region
  $region42: #{rc_1d_forward.1} parent=0 // pred_check
    _
  $region43: #{rc_1d_forward.1} parent=0 // pred_check_branch
    %597 = sbr.rel (0) target = $region45
  $region44: #{rc_1d_forward.1} parent=0 // pred_region
    _
  $region45: #{rc_1d_forward.1} parent=0 // pred_fallthru
    _

</llo_original>
